<compile_context>
chip_gen: v6e
topology: v6e:2x2x1
jax: 0.10.0
libtpu: 0.0.40
codegen_flags: <defaults>
</compile_context>

<pallas_src>
import functools

import jax
import jax.numpy as jnp
from jax.experimental import pallas as pl
from jax.experimental.pallas import tpu as pltpu

_HIGHEST = jax.lax.Precision.HIGHEST


# ----------------------------------------------------------------------------- helpers


def _round_up(x, m):
    return ((x + m - 1) // m) * m


def _pad_cast_2d(a, rows, cols, dtype):
    """Zero-pad to (rows, cols) and cast; no-op (no copy) if already in final form."""
    a = jnp.asarray(a)
    if a.shape != (rows, cols):
        a = jnp.pad(a, ((0, rows - a.shape[0]), (0, cols - a.shape[1])))
    if a.dtype != dtype:
        a = a.astype(dtype)
    return a


def _mask_and_scale(adj):
    """Factor a row-normalized mean adjacency  A = diag(1/deg) @ M  with M in {0,1}.

    The int8 mask is exact and half the bytes of bf16; the f32 1/deg scale is applied
    in the epilogue, so no 1/deg quantization error enters the aggregation.
    """
    adj = jnp.asarray(adj)
    mask = (adj > 0)
    deg = jnp.sum(mask, axis=1, keepdims=True).astype(jnp.float32)
    scale = 1.0 / jnp.maximum(deg, 1.0)          # zero-degree rows aggregate to zero
    return mask.astype(jnp.int8), scale


# ------------------------------------------------------------- tiled single-layer path


def _sage_tiled_kernel(mask_ref, hsrc_ref, hdst_ref, scale_ref, wself_ref, wneigh_ref,
                       b_ref, out_ref, agg_ref, zself_ref, *, apply_relu):
    k = pl.program_id(1)

    @pl.when(k == 0)
    def _init():
        agg_ref[...] = jnp.zeros_like(agg_ref)
        # Hoisted self-projection: depends only on the dst tile, so compute it once per
        # dst tile instead of inside the last-k epilogue (shortens the serial tail).
        zself_ref[...] = jnp.dot(hdst_ref[...].astype(jnp.float32), wself_ref[...],
                                 preferred_element_type=jnp.float32)

    # {0,1} mask streamed from HBM at 1 byte/elem; cast to bf16 on-chip so the matmul
    # runs the bf16 MXU path on every generation (v7x has no integer MXU). f32 accum.
    agg_ref[...] += jnp.dot(mask_ref[...].astype(jnp.bfloat16), hsrc_ref[...],
                            preferred_element_type=jnp.float32)

    @pl.when(k == pl.num_programs(1) - 1)
    def _epilogue():
        agg = agg_ref[...] * scale_ref[...]          # exact f32 per-row 1/deg
        z = (zself_ref[...]
             + jnp.dot(agg, wneigh_ref[...], preferred_element_type=jnp.float32)
             + b_ref[...])
        if apply_relu:
            z = jnp.maximum(z, 0.0)
        out_ref[...] = z.astype(out_ref.dtype)


def sage_conv_tiled_masked(mask, deg_inv, h, w_self, w_neigh, bias, *, apply_relu,
                           tm=256, tk=2048):
    """One SAGEConv('mean') layer from a pre-factored adjacency (int8 mask + 1/deg).

    Callers that already hold aligned int8/bf16 tensors pay no wrapper-side copies.
    """
    n_dst, n_src = int(mask.shape[0]), int(mask.shape[1])
    f_in, f_out = int(w_self.shape[0]), int(w_self.shape[1])
    assert int(h.shape[0]) == n_src and int(h.shape[1]) == f_in
    assert tm % 32 == 0 and tk % 128 == 0

    # Clamp tiles to the (aligned) problem so tiny layers stay single-block.
    tm_eff = min(tm, _round_up(n_dst, 32))
    tk_eff = min(tk, _round_up(n_src, 128))
    n_dst_p = _round_up(n_dst, tm_eff)
    n_src_p = _round_up(n_src, tk_eff)
    h_rows_p = max(n_src_p, n_dst_p)     # dst (self) features are read from h's prefix
    f_in_p = _round_up(f_in, 128)
    f_out_p = _round_up(f_out, 128)

    mask_p = _pad_cast_2d(mask, n_dst_p, n_src_p, jnp.int8)
    h_p = _pad_cast_2d(h, h_rows_p, f_in_p, jnp.bfloat16)
    scale_p = _pad_cast_2d(jnp.asarray(deg_inv, jnp.float32).reshape(-1, 1),
                           n_dst_p, 1, jnp.float32)
    wself_p = _pad_cast_2d(w_self, f_in_p, f_out_p, jnp.float32)
    wneigh_p = _pad_cast_2d(w_neigh, f_in_p, f_out_p, jnp.float32)
    b_p = _pad_cast_2d(jnp.asarray(bias, jnp.float32).reshape(1, -1), 1, f_out_p,
                       jnp.float32)

    grid = (n_dst_p // tm_eff, n_src_p // tk_eff)

    flops = 2 * n_dst_p * n_src_p * f_in_p + 2 * n_dst_p * f_in_p * f_out_p * 2
    # h_src is re-streamed once per dst tile.
    bytes_accessed = (int(mask_p.size)
                      + n_src_p * f_in_p * 2 * grid[0]
                      + n_dst_p * f_in_p * 2
                      + n_dst_p * 4
                      + (int(wself_p.size) + int(wneigh_p.size) + int(b_p.size)) * 4
                      + n_dst_p * f_out_p * 4)

    vmem_est = (2 * tm_eff * tk_eff                    # mask tile (int8), double-buffered
                + 2 * tk_eff * f_in_p * 2              # src-feature tile (bf16)
                + 2 * tm_eff * f_in_p * 2              # dst-feature tile (bf16)
                + 2 * tm_eff * 128 * 4                 # scale tile (lane-padded f32)
                + 2 * 2 * f_in_p * f_out_p * 4         # weights
                + 2 * 8 * f_out_p * 4                  # bias
                + 2 * tm_eff * f_out_p * 4             # output tile
                + tm_eff * (f_in_p + f_out_p) * 4)     # accumulators
    vmem_limit = int(min(max(2 * vmem_est, 32 << 20), 56 << 20))

    out_p = pl.pallas_call(
        functools.partial(_sage_tiled_kernel, apply_relu=apply_relu),
        out_shape=jax.ShapeDtypeStruct((n_dst_p, f_out_p), jnp.float32),
        grid_spec=pltpu.PrefetchScalarGridSpec(
            num_scalar_prefetch=0,
            grid=grid,
            in_specs=[
                pl.BlockSpec((tm_eff, tk_eff), lambda i, k: (i, k)),      # {0,1} mask
                pl.BlockSpec((tk_eff, f_in_p), lambda i, k: (k, 0)),      # src features
                pl.BlockSpec((tm_eff, f_in_p), lambda i, k: (i, 0)),      # dst features
                pl.BlockSpec((tm_eff, 1), lambda i, k: (i, 0)),           # 1/deg scale
                pl.BlockSpec((f_in_p, f_out_p), lambda i, k: (0, 0)),     # W_self
                pl.BlockSpec((f_in_p, f_out_p), lambda i, k: (0, 0)),     # W_neigh
                pl.BlockSpec((1, f_out_p), lambda i, k: (0, 0)),          # bias
            ],
            out_specs=pl.BlockSpec((tm_eff, f_out_p), lambda i, k: (i, 0)),
            scratch_shapes=[pltpu.VMEM((tm_eff, f_in_p), jnp.float32),    # agg accumulator
                            pltpu.VMEM((tm_eff, f_out_p), jnp.float32)],  # hoisted self-proj
        ),
        compiler_params=pltpu.CompilerParams(
            dimension_semantics=("parallel", "arbitrary"),
            vmem_limit_bytes=vmem_limit),
        cost_estimate=pl.CostEstimate(flops=int(flops), transcendentals=0,
                                      bytes_accessed=int(bytes_accessed)),
    )(mask_p, h_p, h_p, scale_p, wself_p, wneigh_p, b_p)

    return out_p[:n_dst, :f_out]


def sage_conv_tiled(adj, h, w_self, w_neigh, bias, *, apply_relu, tm=256, tk=2048):
    """Convenience wrapper: factor a row-normalized mean adjacency, then run tiled."""
    mask, deg_inv = _mask_and_scale(adj)
    return sage_conv_tiled_masked(mask, deg_inv, h, w_self, w_neigh, bias,
                                  apply_relu=apply_relu, tm=tm, tk=tk)


# --------------------------------------------------------------- fused multi-layer path


def _fused_dist_sage_kernel(*refs, n_layers, n_dst_pad):
    """All SAGE layers in one kernel; intermediates live in VMEM scratch (bf16)."""
    x_ref = refs[0]
    adj_refs = refs[1:1 + n_layers]
    wself_refs = refs[1 + n_layers:1 + 2 * n_layers]
    wneigh_refs = refs[1 + 2 * n_layers:1 + 3 * n_layers]
    b_refs = refs[1 + 3 * n_layers:1 + 4 * n_layers]
    out_ref = refs[1 + 4 * n_layers]
    h_scratch = refs[2 + 4 * n_layers:]          # n_layers - 1 intermediate buffers

    h_ref = x_ref
    for l in range(n_layers):
        h = h_ref[...]                                               # bf16
        # Mean aggregation over neighbours (row-normalized adjacency), f32 accumulate.
        agg = jnp.dot(adj_refs[l][...], h, preferred_element_type=jnp.float32)
        # DGL block convention: dst nodes are the prefix of the src nodes.
        # n_dst_pad[l] is a multiple of 16, so this slice is bf16 sublane-aligned.
        h_self = h[:n_dst_pad[l], :]
        # Two dots summed — no lane-axis concatenate / fused-weight temporary.
        z = (jnp.dot(h_self, wself_refs[l][...], preferred_element_type=jnp.float32)
             + jnp.dot(agg.astype(jnp.bfloat16), wneigh_refs[l][...],
                       preferred_element_type=jnp.float32)
             + b_refs[l][...])
        if l != n_layers - 1:
            z = jnp.maximum(z, 0.0)              # ReLU; dropout is identity in eval mode
            h_scratch[l][...] = z.astype(jnp.bfloat16)
            h_ref = h_scratch[l]
        else:
            out_ref[...] = z.astype(out_ref.dtype)


def _fused_vmem_estimate(n_dst_p, n_src_p, f_p, n_layers):
    est = n_src_p[0] * f_p[0] * 2                                   # x (bf16)
    for l in range(n_layers):
        est += n_dst_p[l] * n_src_p[l] * 2                          # adjacency (bf16)
        est += 2 * f_p[l] * f_p[l + 1] * 2                          # W_self + W_neigh
        est += 8 * f_p[l + 1] * 4                                   # bias (sublane pad)
    est += n_dst_p[-1] * f_p[-1] * 4                                # output (f32)
    for l in range(n_layers - 1):
        est += n_dst_p[l] * f_p[l + 1] * 2                          # resident intermediates
    est += max(n_dst_p[l] * (f_p[l] + 3 * f_p[l + 1]) * 4
               for l in range(n_layers))                            # agg/z/cast transients
    return est


def _dist_sage_layerwise(adjs, x, params):
    """Fallback: run each layer through the tiled kernel (v7x megacore, any size)."""
    n_layers = len(params)
    h = jnp.asarray(x, jnp.float32)
    for l, (adj, (w_self, w_neigh, b)) in enumerate(zip(adjs, params)):
        h = sage_conv_tiled(adj, h, w_self, w_neigh, b,
                            apply_relu=(l != n_layers - 1))
    return h


def dist_sage_forward(adjs, x, params, *, vmem_budget_bytes=40 * 1024 * 1024,
                      force_layerwise=False):
    """DistSAGE forward: fused single pallas_call when it fits VMEM, else tiled layers."""
    n_layers = len(params)
    assert len(adjs) == n_layers

    n_dst = [int(a.shape[0]) for a in adjs]
    n_src = [int(a.shape[1]) for a in adjs]
    feats = [int(x.shape[1])] + [int(p[0].shape[1]) for p in params]
    assert n_src[0] == int(x.shape[0])
    for l in range(1, n_layers):
        assert n_src[l] == n_dst[l - 1], "DGL block convention: dst(l-1) == src(l)"

    # Padded dims: node counts -> multiples of 16 (bf16 sublane), features -> 128 (lanes).
    n_dst_p = [_round_up(n, 16) for n in n_dst]
    n_src_p = [_round_up(n, 16) for n in n_src]
    for l in range(1, n_layers):
        n_src_p[l] = n_dst_p[l - 1]
    f_p = [_round_up(f, 128) for f in feats]

    if force_layerwise or _fused_vmem_estimate(n_dst_p, n_src_p, f_p,
                                               n_layers) > vmem_budget_bytes:
        # Whole-graph residents don't fit in VMEM (realistic layer-0 fan-outs, or
        # v7x's 64 MiB per-TC budget): run layer-by-layer through the tiled kernel.
        return _dist_sage_layerwise(adjs, x, params)

    x_p = _pad_cast_2d(x, n_src_p[0], f_p[0], jnp.bfloat16)
    adjs_p, wself_p, wneigh_p, bs_p = [], [], [], []
    for l in range(n_layers):
        w_self, w_neigh, b = params[l]
        # Zero padding is load-bearing: padded intermediate rows become ReLU(bias) != 0
        # and must be killed by exactly-zero padded adjacency columns in layer l+1.
        adjs_p.append(_pad_cast_2d(adjs[l], n_dst_p[l], n_src_p[l], jnp.bfloat16))
        wself_p.append(_pad_cast_2d(w_self, f_p[l], f_p[l + 1], jnp.bfloat16))
        wneigh_p.append(_pad_cast_2d(w_neigh, f_p[l], f_p[l + 1], jnp.bfloat16))
        bs_p.append(_pad_cast_2d(jnp.asarray(b, jnp.float32).reshape(1, -1),
                                 1, f_p[l + 1], jnp.float32))

    flops = 0
    for l in range(n_layers):
        flops += 2 * n_dst_p[l] * n_src_p[l] * f_p[l]          # aggregation matmul
        flops += 2 * n_dst_p[l] * f_p[l] * f_p[l + 1] * 2      # two projection matmuls
    bytes_accessed = (int(x_p.size) * 2
                      + sum(int(a.size) * 2 for a in adjs_p)
                      + sum(int(w.size) * 2 for w in wself_p + wneigh_p)
                      + sum(int(b.size) * 4 for b in bs_p)
                      + n_dst_p[-1] * f_p[-1] * 4)

    vmem = pl.BlockSpec(memory_space=pltpu.MemorySpace.VMEM)
    n_inputs = 1 + 4 * n_layers

    out_p = pl.pallas_call(
        functools.partial(_fused_dist_sage_kernel,
                          n_layers=n_layers, n_dst_pad=tuple(n_dst_p)),
        out_shape=jax.ShapeDtypeStruct((n_dst_p[-1], f_p[-1]), jnp.float32),
        in_specs=[vmem] * n_inputs,
        out_specs=vmem,
        scratch_shapes=[pltpu.VMEM((n_dst_p[l], f_p[l + 1]), jnp.bfloat16)
                        for l in range(n_layers - 1)],
        compiler_params=pltpu.CompilerParams(
            vmem_limit_bytes=int(56 * 1024 * 1024)),   # < 64 MiB v7x physical budget
        cost_estimate=pl.CostEstimate(flops=int(flops), transcendentals=0,
                                      bytes_accessed=int(bytes_accessed)),
    )(x_p, *adjs_p, *wself_p, *wneigh_p, *bs_p)

    return out_p[:n_dst[-1], :feats[-1]]


# --------------------------------------------------------------------------- reference


def _dist_sage_reference(adjs, x, params, *, operand_dtype=jnp.float32):
    """Pure-JAX reference. operand_dtype=bf16 mirrors the fused kernel's rounding."""
    def rnd(a):
        return jnp.asarray(a, jnp.float32).astype(operand_dtype).astype(jnp.float32)

    h = rnd(x)
    n_layers = len(params)
    for l, (adj, (w_self, w_neigh, b)) in enumerate(zip(adjs, params)):
        n_dst = adj.shape[0]
        agg = jnp.dot(rnd(adj), h, precision=_HIGHEST)
        z = (jnp.dot(h[:n_dst], rnd(w_self), precision=_HIGHEST)
             + jnp.dot(rnd(agg), rnd(w_neigh), precision=_HIGHEST)
             + jnp.asarray(b, jnp.float32).reshape(1, -1))
        if l != n_layers - 1:
            z = jnp.maximum(z, 0.0)
            h = rnd(z)
        else:
            h = z
    return h


# ------------------------------------------------------------------------- test inputs


def _make_mean_adj(key, n_dst, n_src, p=0.3):
    """Random sampled block, row-normalized for 'mean' aggregation.

    Neighbor mean excludes self (DGL SAGEConv('mean') semantics); zero-degree rows
    aggregate to zero (guarded division), matching DGL's behavior.
    """
    a = (jax.random.uniform(key, (n_dst, n_src)) < p).astype(jnp.float32)
    deg = jnp.sum(a, axis=1, keepdims=True)
    return a / jnp.maximum(deg, 1.0)


def _init_sage_params(key, in_feat, out_feat):
    k1, k2 = jax.random.split(key)
    scale = 1.0 / jnp.sqrt(jnp.float32(in_feat))
    w_self = jax.random.normal(k1, (in_feat, out_feat), jnp.float32) * scale
    w_neigh = jax.random.normal(k2, (in_feat, out_feat), jnp.float32) * scale
    bias = jnp.zeros((1, out_feat), jnp.float32)
    return w_self, w_neigh, bias


if __name__ == "__main__":
    # Small DistSAGE config: in_feats=32, n_hidden=32, n_classes=16, n_layers=3.
    in_feats, n_hidden, n_classes, n_layers = 32, 32, 16, 3
    src_counts = [64, 32, 16]
    dst_counts = [32, 16, 8]

    key = jax.random.PRNGKey(0)
    k_x, k_adj, k_w, k_big = jax.random.split(key, 4)

    x = jax.random.normal(k_x, (src_counts[0], in_feats), jnp.float32)

    adj_keys = jax.random.split(k_adj, n_layers)
    adjs = [_make_mean_adj(adj_keys[l], dst_counts[l], src_counts[l])
            for l in range(n_layers)]

    feat_dims = [in_feats] + [n_hidden] * (n_layers - 1) + [n_classes]
    w_keys = jax.random.split(k_w, n_layers)
    params = [_init_sage_params(w_keys[l], feat_dims[l], feat_dims[l + 1])
              for l in range(n_layers)]

    # --- Fused path: one pallas_call, bf16 VMEM-resident intermediates ---
    out = jax.block_until_ready(dist_sage_forward(adjs, x, params))
    assert out.shape == (dst_counts[-1], n_classes), out.shape
    assert out.dtype == jnp.float32
    ref_bf16 = _dist_sage_reference(adjs, x, params, operand_dtype=jnp.bfloat16)
    rel = float(jnp.max(jnp.abs(out - ref_bf16)) / (jnp.max(jnp.abs(ref_bf16)) + 1e-6))
    assert rel < 2e-2, f"fused kernel mismatch: rel err {rel}"

    # --- Layer-wise fallback path (exercises the tiled kernel per layer) ---
    out_lw = jax.block_until_ready(
        dist_sage_forward(adjs, x, params, force_layerwise=True))
    ref_f32 = _dist_sage_reference(adjs, x, params, operand_dtype=jnp.float32)
    rel_lw = float(jnp.max(jnp.abs(out_lw - ref_f32)) / (jnp.max(jnp.abs(ref_f32)) + 1e-6))
    assert rel_lw < 5e-2, f"layerwise path mismatch: rel err {rel_lw}"

    # --- Production-sized single tiled layer (int8 mask, bf16 features, f32 acc) ---
    n_dst_b, n_src_b, f_b = 512, 4096, 128
    kb1, kb2, kb3, kb4 = jax.random.split(k_big, 4)
    adj_b = _make_mean_adj(kb1, n_dst_b, n_src_b, p=0.02)
    h_b = jax.random.normal(kb2, (n_src_b, f_b), jnp.float32)
    w_self_b = jax.random.normal(kb3, (f_b, f_b), jnp.float32) / jnp.sqrt(jnp.float32(f_b))
    w_neigh_b = jax.random.normal(kb4, (f_b, f_b), jnp.float32) / jnp.sqrt(jnp.float32(f_b))
    bias_b = jnp.zeros((1, f_b), jnp.float32)

    out_b = jax.block_until_ready(
        sage_conv_tiled(adj_b, h_b, w_self_b, w_neigh_b, bias_b, apply_relu=True))

    mask_f = (adj_b > 0).astype(jnp.float32)
    scale_f = 1.0 / jnp.maximum(jnp.sum(mask_f, axis=1, keepdims=True), 1.0)
    h_r = h_b.astype(jnp.bfloat16).astype(jnp.float32)
    agg_r = scale_f * jnp.dot(mask_f, h_r, precision=_HIGHEST)
    ref_b = jnp.maximum(
        jnp.dot(h_r[:n_dst_b], w_self_b, precision=_HIGHEST)
        + jnp.dot(agg_r, w_neigh_b, precision=_HIGHEST) + bias_b, 0.0)
    rel_b = float(jnp.max(jnp.abs(out_b - ref_b)) / (jnp.max(jnp.abs(ref_b)) + 1e-6))
    assert rel_b < 2e-2, f"tiled kernel mismatch: rel err {rel_b}"

    print("KERNEL_OK")
</pallas_src>

<mosaic_0001>
module attributes {stable_mosaic.version = 11 : i64} {
  func.func @_fused_dist_sage_kernel(%arg0: memref<64x128xbf16, #tpu.memory_space<vmem>>, %arg1: memref<32x64xbf16, #tpu.memory_space<vmem>>, %arg2: memref<16x32xbf16, #tpu.memory_space<vmem>>, %arg3: memref<16x16xbf16, #tpu.memory_space<vmem>>, %arg4: memref<128x128xbf16, #tpu.memory_space<vmem>>, %arg5: memref<128x128xbf16, #tpu.memory_space<vmem>>, %arg6: memref<128x128xbf16, #tpu.memory_space<vmem>>, %arg7: memref<128x128xbf16, #tpu.memory_space<vmem>>, %arg8: memref<128x128xbf16, #tpu.memory_space<vmem>>, %arg9: memref<128x128xbf16, #tpu.memory_space<vmem>>, %arg10: memref<1x128xf32, #tpu.memory_space<vmem>>, %arg11: memref<1x128xf32, #tpu.memory_space<vmem>>, %arg12: memref<1x128xf32, #tpu.memory_space<vmem>>, %arg13: memref<16x128xf32, #tpu.memory_space<vmem>>, %arg14: memref<32x128xbf16, #tpu.memory_space<vmem>>, %arg15: memref<16x128xbf16, #tpu.memory_space<vmem>>) attributes {dimension_semantics = [], scalar_prefetch = 0 : i64, scratch_operands = 2 : i64, tpu.core_type = #tpu.core_type<tc>} {
    %c0 = arith.constant 0 : index
    %c0_0 = arith.constant 0 : index
    %0 = vector.load %arg0[%c0, %c0_0] : memref<64x128xbf16, #tpu.memory_space<vmem>>, vector<64x128xbf16>
    %c0_1 = arith.constant 0 : index
    %c0_2 = arith.constant 0 : index
    %1 = vector.load %arg1[%c0_1, %c0_2] : memref<32x64xbf16, #tpu.memory_space<vmem>>, vector<32x64xbf16>
    %cst = arith.constant dense<0.000000e+00> : vector<32x128xf32>
    %2 = tpu.matmul %1, %0, %cst {dimension_numbers = #tpu.dot_dimension_numbers<[1], [0], [0], [1], [0, 0, 1, 1], [], []>} : vector<32x64xbf16>, vector<64x128xbf16>, vector<32x128xf32> -> vector<32x128xf32>
    %3 = vector.extract_strided_slice %0 {offsets = [0, 0], sizes = [32, 128], strides = [1, 1]} : vector<64x128xbf16> to vector<32x128xbf16>
    %c0_3 = arith.constant 0 : index
    %c0_4 = arith.constant 0 : index
    %4 = vector.load %arg4[%c0_3, %c0_4] : memref<128x128xbf16, #tpu.memory_space<vmem>>, vector<128x128xbf16>
    %cst_5 = arith.constant dense<0.000000e+00> : vector<32x128xf32>
    %5 = tpu.matmul %3, %4, %cst_5 {dimension_numbers = #tpu.dot_dimension_numbers<[1], [0], [0], [1], [0, 0, 1, 1], [], []>} : vector<32x128xbf16>, vector<128x128xbf16>, vector<32x128xf32> -> vector<32x128xf32>
    %6 = arith.truncf %2 : vector<32x128xf32> to vector<32x128xbf16>
    %c0_6 = arith.constant 0 : index
    %c0_7 = arith.constant 0 : index
    %7 = vector.load %arg7[%c0_6, %c0_7] : memref<128x128xbf16, #tpu.memory_space<vmem>>, vector<128x128xbf16>
    %cst_8 = arith.constant dense<0.000000e+00> : vector<32x128xf32>
    %8 = tpu.matmul %6, %7, %cst_8 {dimension_numbers = #tpu.dot_dimension_numbers<[1], [0], [0], [1], [0, 0, 1, 1], [], []>} : vector<32x128xbf16>, vector<128x128xbf16>, vector<32x128xf32> -> vector<32x128xf32>
    %9 = arith.addf %5, %8 : vector<32x128xf32>
    %c0_9 = arith.constant 0 : index
    %c0_10 = arith.constant 0 : index
    %10 = vector.load %arg10[%c0_9, %c0_10] : memref<1x128xf32, #tpu.memory_space<vmem>>, vector<1x128xf32>
    %11 = vector.broadcast %10 : vector<1x128xf32> to vector<32x128xf32>
    %12 = arith.addf %9, %11 : vector<32x128xf32>
    %cst_11 = arith.constant 0.000000e+00 : f32
    %13 = vector.broadcast %cst_11 : f32 to vector<32x128xf32>
    %14 = arith.maximumf %12, %13 : vector<32x128xf32>
    %15 = arith.truncf %14 : vector<32x128xf32> to vector<32x128xbf16>
    %c0_12 = arith.constant 0 : index
    %c0_13 = arith.constant 0 : index
    %16 = vector.load %arg14[%c0_12, %c0_13] : memref<32x128xbf16, #tpu.memory_space<vmem>>, vector<32x128xbf16>
    tpu.vector_store %arg14[%c0_12, %c0_13], %15 {strides = array<i32>} : memref<32x128xbf16, #tpu.memory_space<vmem>>, vector<32x128xbf16>,
    %c0_14 = arith.constant 0 : index
    %c0_15 = arith.constant 0 : index
    %17 = vector.load %arg14[%c0_14, %c0_15] : memref<32x128xbf16, #tpu.memory_space<vmem>>, vector<32x128xbf16>
    %c0_16 = arith.constant 0 : index
    %c0_17 = arith.constant 0 : index
    %18 = vector.load %arg2[%c0_16, %c0_17] : memref<16x32xbf16, #tpu.memory_space<vmem>>, vector<16x32xbf16>
    %cst_18 = arith.constant dense<0.000000e+00> : vector<16x128xf32>
    %19 = tpu.matmul %18, %17, %cst_18 {dimension_numbers = #tpu.dot_dimension_numbers<[1], [0], [0], [1], [0, 0, 1, 1], [], []>} : vector<16x32xbf16>, vector<32x128xbf16>, vector<16x128xf32> -> vector<16x128xf32>
    %20 = vector.extract_strided_slice %17 {offsets = [0, 0], sizes = [16, 128], strides = [1, 1]} : vector<32x128xbf16> to vector<16x128xbf16>
    %c0_19 = arith.constant 0 : index
    %c0_20 = arith.constant 0 : index
    %21 = vector.load %arg5[%c0_19, %c0_20] : memref<128x128xbf16, #tpu.memory_space<vmem>>, vector<128x128xbf16>
    %cst_21 = arith.constant dense<0.000000e+00> : vector<16x128xf32>
    %22 = tpu.matmul %20, %21, %cst_21 {dimension_numbers = #tpu.dot_dimension_numbers<[1], [0], [0], [1], [0, 0, 1, 1], [], []>} : vector<16x128xbf16>, vector<128x128xbf16>, vector<16x128xf32> -> vector<16x128xf32>
    %23 = arith.truncf %19 : vector<16x128xf32> to vector<16x128xbf16>
    %c0_22 = arith.constant 0 : index
    %c0_23 = arith.constant 0 : index
    %24 = vector.load %arg8[%c0_22, %c0_23] : memref<128x128xbf16, #tpu.memory_space<vmem>>, vector<128x128xbf16>
    %cst_24 = arith.constant dense<0.000000e+00> : vector<16x128xf32>
    %25 = tpu.matmul %23, %24, %cst_24 {dimension_numbers = #tpu.dot_dimension_numbers<[1], [0], [0], [1], [0, 0, 1, 1], [], []>} : vector<16x128xbf16>, vector<128x128xbf16>, vector<16x128xf32> -> vector<16x128xf32>
    %26 = arith.addf %22, %25 : vector<16x128xf32>
    %c0_25 = arith.constant 0 : index
    %c0_26 = arith.constant 0 : index
    %27 = vector.load %arg11[%c0_25, %c0_26] : memref<1x128xf32, #tpu.memory_space<vmem>>, vector<1x128xf32>
    %28 = vector.broadcast %27 : vector<1x128xf32> to vector<16x128xf32>
    %29 = arith.addf %26, %28 : vector<16x128xf32>
    %cst_27 = arith.constant 0.000000e+00 : f32
    %30 = vector.broadcast %cst_27 : f32 to vector<16x128xf32>
    %31 = arith.maximumf %29, %30 : vector<16x128xf32>
    %32 = arith.truncf %31 : vector<16x128xf32> to vector<16x128xbf16>
    %c0_28 = arith.constant 0 : index
    %c0_29 = arith.constant 0 : index
    %33 = vector.load %arg15[%c0_28, %c0_29] : memref<16x128xbf16, #tpu.memory_space<vmem>>, vector<16x128xbf16>
    tpu.vector_store %arg15[%c0_28, %c0_29], %32 {strides = array<i32>} : memref<16x128xbf16, #tpu.memory_space<vmem>>, vector<16x128xbf16>,
    %c0_30 = arith.constant 0 : index
    %c0_31 = arith.constant 0 : index
    %34 = vector.load %arg15[%c0_30, %c0_31] : memref<16x128xbf16, #tpu.memory_space<vmem>>, vector<16x128xbf16>
    %c0_32 = arith.constant 0 : index
    %c0_33 = arith.constant 0 : index
    %35 = vector.load %arg3[%c0_32, %c0_33] : memref<16x16xbf16, #tpu.memory_space<vmem>>, vector<16x16xbf16>
    %cst_34 = arith.constant dense<0.000000e+00> : vector<16x128xf32>
    %36 = tpu.matmul %35, %34, %cst_34 {dimension_numbers = #tpu.dot_dimension_numbers<[1], [0], [0], [1], [0, 0, 1, 1], [], []>} : vector<16x16xbf16>, vector<16x128xbf16>, vector<16x128xf32> -> vector<16x128xf32>
    %c0_35 = arith.constant 0 : index
    %c0_36 = arith.constant 0 : index
    %37 = vector.load %arg6[%c0_35, %c0_36] : memref<128x128xbf16, #tpu.memory_space<vmem>>, vector<128x128xbf16>
    %cst_37 = arith.constant dense<0.000000e+00> : vector<16x128xf32>
    %38 = tpu.matmul %34, %37, %cst_37 {dimension_numbers = #tpu.dot_dimension_numbers<[1], [0], [0], [1], [0, 0, 1, 1], [], []>} : vector<16x128xbf16>, vector<128x128xbf16>, vector<16x128xf32> -> vector<16x128xf32>
    %39 = arith.truncf %36 : vector<16x128xf32> to vector<16x128xbf16>
    %c0_38 = arith.constant 0 : index
    %c0_39 = arith.constant 0 : index
    %40 = vector.load %arg9[%c0_38, %c0_39] : memref<128x128xbf16, #tpu.memory_space<vmem>>, vector<128x128xbf16>
    %cst_40 = arith.constant dense<0.000000e+00> : vector<16x128xf32>
    %41 = tpu.matmul %39, %40, %cst_40 {dimension_numbers = #tpu.dot_dimension_numbers<[1], [0], [0], [1], [0, 0, 1, 1], [], []>} : vector<16x128xbf16>, vector<128x128xbf16>, vector<16x128xf32> -> vector<16x128xf32>
    %42 = arith.addf %38, %41 : vector<16x128xf32>
    %c0_41 = arith.constant 0 : index
    %c0_42 = arith.constant 0 : index
    %43 = vector.load %arg12[%c0_41, %c0_42] : memref<1x128xf32, #tpu.memory_space<vmem>>, vector<1x128xf32>
    %44 = vector.broadcast %43 : vector<1x128xf32> to vector<16x128xf32>
    %45 = arith.addf %42, %44 : vector<16x128xf32>
    %c0_43 = arith.constant 0 : index
    %c0_44 = arith.constant 0 : index
    %46 = vector.load %arg13[%c0_43, %c0_44] : memref<16x128xf32, #tpu.memory_space<vmem>>, vector<16x128xf32>
    tpu.vector_store %arg13[%c0_43, %c0_44], %45 {strides = array<i32>} : memref<16x128xf32, #tpu.memory_space<vmem>>, vector<16x128xf32>,
    return
  }
}

</mosaic_0001>

<llo_original>
// kernel: tpu_custom_call.1
$region0: #{tpu_custom_call.1}
  #allocation0 [shape = 'u32[]', space=smem, size = 0x4, offset = 0x4, fixed_abs, tag = 'smem constant byte address 0x4 - core index']
  #allocation1 [shape = 'u32[144,128]{1,0:T(1,128)}', space=vmem, size = 0x12000, scoped, tag = 'internal scratch']
  #allocation2 [shape = 'bf16[32,128]{1,0:T(8,128)(2,1)}', space=vmem, size = 0x2000, scoped, tag = 'scratch operand']
  #allocation3 [shape = 'bf16[16,128]{1,0:T(8,128)(2,1)}', space=vmem, size = 0x1000, scoped, tag = 'scratch operand']
  %s0 = inlined_call_operand.hbm [shape: bf16[64,128], index: 0, kind: input, shape index: {}]
  %s1 = inlined_call_operand.hbm [shape: bf16[32,64], index: 1, kind: input, shape index: {}]
  %s2 = inlined_call_operand.hbm [shape: bf16[16,32], index: 2, kind: input, shape index: {}]
  %s3 = inlined_call_operand.hbm [shape: bf16[16,16], index: 3, kind: input, shape index: {}]
  %s4 = inlined_call_operand.hbm [shape: bf16[128,128], index: 4, kind: input, shape index: {}]
  %s5 = inlined_call_operand.hbm [shape: bf16[128,128], index: 5, kind: input, shape index: {}]
  %s6 = inlined_call_operand.hbm [shape: bf16[128,128], index: 6, kind: input, shape index: {}]
  %s7 = inlined_call_operand.hbm [shape: bf16[128,128], index: 7, kind: input, shape index: {}]
  %s8 = inlined_call_operand.hbm [shape: bf16[128,128], index: 8, kind: input, shape index: {}]
  %s9 = inlined_call_operand.hbm [shape: bf16[128,128], index: 9, kind: input, shape index: {}]
  %s10 = inlined_call_operand.vmem [shape: f32[1,128], index: 10, kind: input, shape index: {}]
  %s11 = inlined_call_operand.vmem [shape: f32[1,128], index: 11, kind: input, shape index: {}]
  %s12 = inlined_call_operand.vmem [shape: f32[1,128], index: 12, kind: input, shape index: {}]
  %s13 = inlined_call_operand.hbm [shape: f32[16,128], index: 13, kind: output, shape index: {}]
  %s14 = sld [smem:[#allocation0]]
  $region102: #{tpu_custom_call.1} parent=0
    _
  %s16 = ssub.s32 1, %s14
  %s17 = scalar_select 0, %s16, %s14
  $region1: #{tpu_custom_call.1} parent=0
    #allocation4 [shape = 'u8[16384]{0}', space=vmem, size = 0x4000, scoped, tag = 'input window, operand 0, single buffered']
    #allocation5 [shape = 's32[1]{0}', space=sflag, size = 0x4, scoped, tag = 'scoped memory for tpu_custom_call.1']
    #allocation6 [shape = 's32[1]{0}', space=sflag, size = 0x4, scoped, tag = 'scoped memory for tpu_custom_call.1']
    #allocation7 [shape = 'u8[8192]{0}', space=vmem, size = 0x2000, scoped, tag = 'input window, operand 1, single buffered']
    #allocation8 [shape = 's32[1]{0}', space=sflag, size = 0x4, scoped, tag = 'scoped memory for tpu_custom_call.1']
    #allocation9 [shape = 'u8[4096]{0}', space=vmem, size = 0x1000, scoped, tag = 'input window, operand 2, single buffered']
    #allocation10 [shape = 'u8[4096]{0}', space=vmem, size = 0x1000, scoped, tag = 'input window, operand 3, single buffered']
    #allocation11 [shape = 's32[1]{0}', space=sflag, size = 0x4, scoped, tag = 'scoped memory for tpu_custom_call.1']
    #allocation12 [shape = 'u8[32768]{0}', space=vmem, size = 0x8000, scoped, tag = 'input window, operand 4, single buffered']
    #allocation13 [shape = 'u8[32768]{0}', space=vmem, size = 0x8000, scoped, tag = 'input window, operand 5, single buffered']
    #allocation14 [shape = 's32[1]{0}', space=sflag, size = 0x4, scoped, tag = 'scoped memory for tpu_custom_call.1']
    #allocation15 [shape = 'u8[32768]{0}', space=vmem, size = 0x8000, scoped, tag = 'input window, operand 6, single buffered']
    #allocation16 [shape = 'u8[32768]{0}', space=vmem, size = 0x8000, scoped, tag = 'input window, operand 7, single buffered']
    #allocation17 [shape = 's32[1]{0}', space=sflag, size = 0x4, scoped, tag = 'scoped memory for tpu_custom_call.1']
    #allocation18 [shape = 'u8[32768]{0}', space=vmem, size = 0x8000, scoped, tag = 'input window, operand 8, single buffered']
    #allocation19 [shape = 'u8[32768]{0}', space=vmem, size = 0x8000, scoped, tag = 'input window, operand 9, single buffered']
    #allocation20 [shape = 's32[1]{0}', space=sflag, size = 0x4, scoped, tag = 'scoped memory for tpu_custom_call.1']
    #allocation21 [shape = 'u8[8192]{0}', space=vmem, size = 0x2000, scoped, tag = 'output window, operand 0, single buffered']
    %18 = vsyncpa [#allocation5], 0
    %19 = vsyncpa [#allocation8], 0
    %20 = vsyncpa [#allocation11], 0
    %21 = vsyncpa [#allocation14], 0
    %22 = vsyncpa [#allocation17], 0
    %23 = vsyncpa [#allocation20], 0
    %24 = vsyncpa [#allocation6], 0
    // Predicated region
    $region2: #{tpu_custom_call.1} parent=1 // pred_check
      _
    $region3: #{tpu_custom_call.1} parent=1 // pred_check_branch
      %26 = sbr.rel (0) target = $region5
    $region4: #{tpu_custom_call.1} parent=1 // pred_region
      %s28 = ssub.s32 512, 512
      %29 = vsyncadd [#allocation5], %s28
      %s30 = sshll.u32 [#allocation4], 4
      %s31 = int_to_ptr.vmem [resolvable:$true] %s30
      %36 = dma.hbm_to_vmem [thread:$0]  %s0, 512, %s31, [#allocation5], 64, 64, 4
    $region5: #{tpu_custom_call.1} parent=1 // pred_fallthru
      _
    // Predicated region
    $region6: #{tpu_custom_call.1} parent=1 // pred_check
      _
    $region7: #{tpu_custom_call.1} parent=1 // pred_check_branch
      %38 = sbr.rel (0) target = $region9
    $region8: #{tpu_custom_call.1} parent=1 // pred_region
      %s40 = ssub.s32 256, 256
      %41 = vsyncadd [#allocation8], %s40
      %s42 = sshll.u32 [#allocation7], 4
      %s43 = int_to_ptr.vmem [resolvable:$true] %s42
      %48 = dma.hbm_to_vmem [thread:$0]  %s1, 256, %s43, [#allocation8], 64, 64, 4
    $region9: #{tpu_custom_call.1} parent=1 // pred_fallthru
      _
    // Predicated region
    $region10: #{tpu_custom_call.1} parent=1 // pred_check
      _
    $region11: #{tpu_custom_call.1} parent=1 // pred_check_branch
      %50 = sbr.rel (0) target = $region13
    $region12: #{tpu_custom_call.1} parent=1 // pred_region
      %s52 = ssub.s32 128, 128
      %53 = vsyncadd [#allocation8], %s52
      %s54 = sshll.u32 [#allocation9], 4
      %s55 = int_to_ptr.vmem [resolvable:$true] %s54
      %60 = dma.hbm_to_vmem [thread:$0]  %s2, 128, %s55, [#allocation8], 64, 64, 4
    $region13: #{tpu_custom_call.1} parent=1 // pred_fallthru
      _
    // Predicated region
    $region14: #{tpu_custom_call.1} parent=1 // pred_check
      _
    $region15: #{tpu_custom_call.1} parent=1 // pred_check_branch
      %62 = sbr.rel (0) target = $region17
    $region16: #{tpu_custom_call.1} parent=1 // pred_region
      %s64 = ssub.s32 128, 128
      %65 = vsyncadd [#allocation11], %s64
      %s66 = sshll.u32 [#allocation10], 4
      %s67 = int_to_ptr.vmem [resolvable:$true] %s66
      %72 = dma.hbm_to_vmem [thread:$0]  %s3, 128, %s67, [#allocation11], 64, 64, 4
    $region17: #{tpu_custom_call.1} parent=1 // pred_fallthru
      _
    // Predicated region
    $region18: #{tpu_custom_call.1} parent=1 // pred_check
      _
    $region19: #{tpu_custom_call.1} parent=1 // pred_check_branch
      %74 = sbr.rel (0) target = $region21
    $region20: #{tpu_custom_call.1} parent=1 // pred_region
      %s76 = ssub.s32 1024, 1024
      %77 = vsyncadd [#allocation11], %s76
      %s78 = sshll.u32 [#allocation12], 4
      %s79 = int_to_ptr.vmem [resolvable:$true] %s78
      %84 = dma.hbm_to_vmem [thread:$0]  %s4, 1024, %s79, [#allocation11], 64, 64, 4
    $region21: #{tpu_custom_call.1} parent=1 // pred_fallthru
      _
    // Predicated region
    $region22: #{tpu_custom_call.1} parent=1 // pred_check
      _
    $region23: #{tpu_custom_call.1} parent=1 // pred_check_branch
      %86 = sbr.rel (0) target = $region25
    $region24: #{tpu_custom_call.1} parent=1 // pred_region
      %s88 = ssub.s32 1024, 1024
      %89 = vsyncadd [#allocation14], %s88
      %s90 = sshll.u32 [#allocation13], 4
      %s91 = int_to_ptr.vmem [resolvable:$true] %s90
      %96 = dma.hbm_to_vmem [thread:$0]  %s5, 1024, %s91, [#allocation14], 64, 64, 4
    $region25: #{tpu_custom_call.1} parent=1 // pred_fallthru
      _
    // Predicated region
    $region26: #{tpu_custom_call.1} parent=1 // pred_check
      _
    $region27: #{tpu_custom_call.1} parent=1 // pred_check_branch
      %98 = sbr.rel (0) target = $region29
    $region28: #{tpu_custom_call.1} parent=1 // pred_region
      %s100 = ssub.s32 1024, 1024
      %101 = vsyncadd [#allocation14], %s100
      %s102 = sshll.u32 [#allocation15], 4
      %s103 = int_to_ptr.vmem [resolvable:$true] %s102
      %108 = dma.hbm_to_vmem [thread:$0]  %s6, 1024, %s103, [#allocation14], 64, 64, 4
    $region29: #{tpu_custom_call.1} parent=1 // pred_fallthru
      _
    // Predicated region
    $region30: #{tpu_custom_call.1} parent=1 // pred_check
      _
    $region31: #{tpu_custom_call.1} parent=1 // pred_check_branch
      %110 = sbr.rel (0) target = $region33
    $region32: #{tpu_custom_call.1} parent=1 // pred_region
      %s112 = ssub.s32 1024, 1024
      %113 = vsyncadd [#allocation17], %s112
      %s114 = sshll.u32 [#allocation16], 4
      %s115 = int_to_ptr.vmem [resolvable:$true] %s114
      %120 = dma.hbm_to_vmem [thread:$0]  %s7, 1024, %s115, [#allocation17], 64, 64, 4
    $region33: #{tpu_custom_call.1} parent=1 // pred_fallthru
      _
    // Predicated region
    $region34: #{tpu_custom_call.1} parent=1 // pred_check
      _
    $region35: #{tpu_custom_call.1} parent=1 // pred_check_branch
      %122 = sbr.rel (0) target = $region37
    $region36: #{tpu_custom_call.1} parent=1 // pred_region
      %s124 = ssub.s32 1024, 1024
      %125 = vsyncadd [#allocation17], %s124
      %s126 = sshll.u32 [#allocation18], 4
      %s127 = int_to_ptr.vmem [resolvable:$true] %s126
      %132 = dma.hbm_to_vmem [thread:$0]  %s8, 1024, %s127, [#allocation17], 64, 64, 4
    $region37: #{tpu_custom_call.1} parent=1 // pred_fallthru
      _
    // Predicated region
    $region38: #{tpu_custom_call.1} parent=1 // pred_check
      _
    $region39: #{tpu_custom_call.1} parent=1 // pred_check_branch
      %134 = sbr.rel (0) target = $region41
    $region40: #{tpu_custom_call.1} parent=1 // pred_region
      %s136 = ssub.s32 1024, 1024
      %137 = vsyncadd [#allocation20], %s136
      %s138 = sshll.u32 [#allocation19], 4
      %s139 = int_to_ptr.vmem [resolvable:$true] %s138
      %144 = dma.hbm_to_vmem [thread:$0]  %s9, 1024, %s139, [#allocation20], 64, 64, 4
    $region41: #{tpu_custom_call.1} parent=1 // pred_fallthru
      _
    // Predicated region
    $region42: #{tpu_custom_call.1} parent=1 // pred_check
      _
    $region43: #{tpu_custom_call.1} parent=1 // pred_check_branch
      %146 = sbr.rel (0) target = $region45
    $region44: #{tpu_custom_call.1} parent=1 // pred_region
      _
    $region45: #{tpu_custom_call.1} parent=1 // pred_fallthru
      _
    // Predicated region
    $region46: #{tpu_custom_call.1} parent=1 // pred_check
      _
    $region47: #{tpu_custom_call.1} parent=1 // pred_check_branch
      %148 = sbr.rel (0) target = $region49
    $region48: #{tpu_custom_call.1} parent=1 // pred_region
      _
    $region49: #{tpu_custom_call.1} parent=1 // pred_fallthru
      _
    // Predicated region
    $region50: #{tpu_custom_call.1} parent=1 // pred_check
      _
    $region51: #{tpu_custom_call.1} parent=1 // pred_check_branch
      %150 = sbr.rel (0) target = $region53
    $region52: #{tpu_custom_call.1} parent=1 // pred_region
      _
    $region53: #{tpu_custom_call.1} parent=1 // pred_fallthru
      _
    // Predicated region
    $region54: #{tpu_custom_call.1} parent=1 // pred_check
      _
    $region55: #{tpu_custom_call.1} parent=1 // pred_check_branch
      %152 = sbr.rel (0) target = $region57
    $region56: #{tpu_custom_call.1} parent=1 // pred_region
      %153 = dma.done [#allocation5], 512
    $region57: #{tpu_custom_call.1} parent=1 // pred_fallthru
      _
    // Predicated region
    $region58: #{tpu_custom_call.1} parent=1 // pred_check
      _
    $region59: #{tpu_custom_call.1} parent=1 // pred_check_branch
      %155 = sbr.rel (0) target = $region61
    $region60: #{tpu_custom_call.1} parent=1 // pred_region
      %156 = dma.done [#allocation8], 256
    $region61: #{tpu_custom_call.1} parent=1 // pred_fallthru
      _
    // Predicated region
    $region62: #{tpu_custom_call.1} parent=1 // pred_check
      _
    $region63: #{tpu_custom_call.1} parent=1 // pred_check_branch
      %158 = sbr.rel (0) target = $region65
    $region64: #{tpu_custom_call.1} parent=1 // pred_region
      %159 = dma.done [#allocation8], 128
    $region65: #{tpu_custom_call.1} parent=1 // pred_fallthru
      _
    // Predicated region
    $region66: #{tpu_custom_call.1} parent=1 // pred_check
      _
    $region67: #{tpu_custom_call.1} parent=1 // pred_check_branch
      %161 = sbr.rel (0) target = $region69
    $region68: #{tpu_custom_call.1} parent=1 // pred_region
      %162 = dma.done [#allocation11], 128
    $region69: #{tpu_custom_call.1} parent=1 // pred_fallthru
      _
    // Predicated region
    $region70: #{tpu_custom_call.1} parent=1 // pred_check
      _
    $region71: #{tpu_custom_call.1} parent=1 // pred_check_branch
      %164 = sbr.rel (0) target = $region73
    $region72: #{tpu_custom_call.1} parent=1 // pred_region
      %165 = dma.done [#allocation11], 1024
    $region73: #{tpu_custom_call.1} parent=1 // pred_fallthru
      _
    // Predicated region
    $region74: #{tpu_custom_call.1} parent=1 // pred_check
      _
    $region75: #{tpu_custom_call.1} parent=1 // pred_check_branch
      %167 = sbr.rel (0) target = $region77
    $region76: #{tpu_custom_call.1} parent=1 // pred_region
      %168 = dma.done [#allocation14], 1024
    $region77: #{tpu_custom_call.1} parent=1 // pred_fallthru
      _
    // Predicated region
    $region78: #{tpu_custom_call.1} parent=1 // pred_check
      _
    $region79: #{tpu_custom_call.1} parent=1 // pred_check_branch
      %170 = sbr.rel (0) target = $region81
    $region80: #{tpu_custom_call.1} parent=1 // pred_region
      %171 = dma.done [#allocation14], 1024
    $region81: #{tpu_custom_call.1} parent=1 // pred_fallthru
      _
    // Predicated region
    $region82: #{tpu_custom_call.1} parent=1 // pred_check
      _
    $region83: #{tpu_custom_call.1} parent=1 // pred_check_branch
      %173 = sbr.rel (0) target = $region85
    $region84: #{tpu_custom_call.1} parent=1 // pred_region
      %174 = dma.done [#allocation17], 1024
    $region85: #{tpu_custom_call.1} parent=1 // pred_fallthru
      _
    // Predicated region
    $region86: #{tpu_custom_call.1} parent=1 // pred_check
      _
    $region87: #{tpu_custom_call.1} parent=1 // pred_check_branch
      %176 = sbr.rel (0) target = $region89
    $region88: #{tpu_custom_call.1} parent=1 // pred_region
      %177 = dma.done [#allocation17], 1024
    $region89: #{tpu_custom_call.1} parent=1 // pred_fallthru
      _
    // Predicated region
    $region90: #{tpu_custom_call.1} parent=1 // pred_check
      _
    $region91: #{tpu_custom_call.1} parent=1 // pred_check_branch
      %179 = sbr.rel (0) target = $region93
    $region92: #{tpu_custom_call.1} parent=1 // pred_region
      %180 = dma.done [#allocation20], 1024
    $region93: #{tpu_custom_call.1} parent=1 // pred_fallthru
      _
    %v182 = vld [vmem:[#allocation4] sm:$0xf]
    %v183 = vld [vmem:[#allocation4 + $0x4] sm:$0xf]
    %v184 = vld [vmem:[#allocation4 + $0x8] sm:$0xf]
    %v185 = vld [vmem:[#allocation4 + $0xc] sm:$0xf]
    %v186 = vld [vmem:[#allocation4 + $0x10] sm:$0xf]
    %v187 = vld [vmem:[#allocation4 + $0x14] sm:$0xf]
    %v188 = vld [vmem:[#allocation4 + $0x18] sm:$0xf]
    %v189 = vld [vmem:[#allocation4 + $0x1c] sm:$0xf]
    %v190 = vld [vmem:[#allocation7] sm:$0xf]
    %v191 = vld [vmem:[#allocation7 + $0x4] sm:$0xf]
    %v192 = vld [vmem:[#allocation7 + $0x8] sm:$0xf]
    %v193 = vld [vmem:[#allocation7 + $0xc] sm:$0xf]
    %v198 = vunpack.c.l.b16 %v190
    %v199 = vunpack.c.l.b16 %v191
    %v200 = vunpack.c.l.b16 %v192
    %v201 = vunpack.c.l.b16 %v193
    %v202 = vpack.c.b16 %v199, %v198
    %v203 = vpack.c.b16 %v201, %v200
    %v212 = vunpack.c.l.b16 %v182
    %v213 = vunpack.c.l.b16 %v183
    %v214 = vunpack.c.l.b16 %v184
    %v215 = vunpack.c.l.b16 %v185
    %v216 = vunpack.c.l.b16 %v186
    %v217 = vunpack.c.l.b16 %v187
    %v218 = vunpack.c.l.b16 %v188
    %v219 = vunpack.c.l.b16 %v189
    %v220 = vpack.c.b16 %v213, %v212
    %v221 = vpack.c.b16 %v215, %v214
    %v222 = vpack.c.b16 %v217, %v216
    %v223 = vpack.c.b16 %v219, %v218
    %vm228 = vcmask 523264
    %v230 = vsel %vm228, %v202, 0
    %v233 = vsel %vm228, %v203, 0
    %235 = vmatprep.subr.bf16.mxu0 0
    %236 = vmatpush1.bf16.msra.mxu0 0
    %237 = vmatprep.subr.bf16.mxu0 0
    %238 = vmatpush1.bf16.msra.mxu0 0
    %239 = vmatprep.subr.bf16.mxu0 0
    %240 = vmatpush1.bf16.msra.mxu0 0
    %241 = vmatprep.subr.bf16.mxu0 0
    %242 = vmatpush1.bf16.msra.mxu0 0
    %243 = vmatprep.subr.bf16.mxu0 0
    %244 = vmatpush1.bf16.msra.mxu0 %v223
    %245 = vmatprep.subr.bf16.mxu0 0
    %246 = vmatpush1.bf16.msra.mxu0 %v222
    %247 = vmatprep.subr.bf16.mxu0 0
    %248 = vmatpush1.bf16.msra.mxu0 %v221
    %249 = vmatprep.subr.bf16.mxu0 0
    %250 = vmatpush1.bf16.msra.mxu0 %v220
    %251 = vmatprep.subr.bf16.mxu0 0
    %252 = vmatpush2.bf16.msra.mxu0 0
    %253 = vmatprep.subr.bf16.mxu0 0
    %254 = vmatpush2.bf16.msra.mxu0 0
    %255 = vmatprep.subr.bf16.mxu0 0
    %256 = vmatpush2.bf16.msra.mxu0 0
    %257 = vmatprep.subr.bf16.mxu0 0
    %258 = vmatpush2.bf16.msra.mxu0 0
    %259 = vmatprep.subr.bf16.mxu0 0
    %260 = vmatpush2.bf16.msra.mxu0 0
    %261 = vmatprep.subr.bf16.mxu0 0
    %262 = vmatpush2.bf16.msra.mxu0 0
    %263 = vmatprep.subr.bf16.mxu0 0
    %264 = vmatpush2.bf16.msra.mxu0 0
    %265 = vmatprep.subr.bf16.mxu0 0
    %266 = vmatpush2.bf16.msra.mxu0 0
    %267 = vmatprep.mubr.bf16.mxu0 0
    %268 = vmatmul.mubr.bf16.gmra.mxu0 %v230
    %v269 = vpop.f32.mrf.mxu0
    %v270 = vadd.f32 0.0, %v269
    %v271 = vpop.f32.mrf.mxu0
    %v272 = vpop.f32.mrf.mxu0
    %v273 = vadd.f32 0.0, %v272
    %v274 = vpop.f32.mrf.mxu0
    %275 = vmatprep.mubr.bf16.mxu0 0
    %276 = vmatmul.mubr.bf16.gmra.mxu0 %v233
    %v277 = vpop.f32.mrf.mxu0
    %v278 = vadd.f32 0.0, %v277
    %v279 = vpop.f32.mrf.mxu0
    %v280 = vpop.f32.mrf.mxu0
    %v281 = vadd.f32 0.0, %v280
    %v282 = vpop.f32.mrf.mxu0
    %283 = vdwg.mxu0
    %v284 = vld [vmem:[#allocation12] sm:$0xf]
    %v285 = vld [vmem:[#allocation12 + $0x4] sm:$0xf]
    %v286 = vld [vmem:[#allocation12 + $0x8] sm:$0xf]
    %v287 = vld [vmem:[#allocation12 + $0xc] sm:$0xf]
    %v288 = vld [vmem:[#allocation12 + $0x10] sm:$0xf]
    %v289 = vld [vmem:[#allocation12 + $0x14] sm:$0xf]
    %v290 = vld [vmem:[#allocation12 + $0x18] sm:$0xf]
    %v291 = vld [vmem:[#allocation12 + $0x1c] sm:$0xf]
    %v292 = vld [vmem:[#allocation12 + $0x20] sm:$0xf]
    %v293 = vld [vmem:[#allocation12 + $0x24] sm:$0xf]
    %v294 = vld [vmem:[#allocation12 + $0x28] sm:$0xf]
    %v295 = vld [vmem:[#allocation12 + $0x2c] sm:$0xf]
    %v296 = vld [vmem:[#allocation12 + $0x30] sm:$0xf]
    %v297 = vld [vmem:[#allocation12 + $0x34] sm:$0xf]
    %v298 = vld [vmem:[#allocation12 + $0x38] sm:$0xf]
    %v299 = vld [vmem:[#allocation12 + $0x3c] sm:$0xf]
    %v300 = vpack.c.bf16 %v273, %v270
    %v301 = vpack.c.bf16 %v281, %v278
    %v302 = vld [vmem:[#allocation16] sm:$0xf]
    %v303 = vld [vmem:[#allocation16 + $0x4] sm:$0xf]
    %v304 = vld [vmem:[#allocation16 + $0x8] sm:$0xf]
    %v305 = vld [vmem:[#allocation16 + $0xc] sm:$0xf]
    %v306 = vld [vmem:[#allocation16 + $0x10] sm:$0xf]
    %v307 = vld [vmem:[#allocation16 + $0x14] sm:$0xf]
    %v308 = vld [vmem:[#allocation16 + $0x18] sm:$0xf]
    %v309 = vld [vmem:[#allocation16 + $0x1c] sm:$0xf]
    %v310 = vld [vmem:[#allocation16 + $0x20] sm:$0xf]
    %v311 = vld [vmem:[#allocation16 + $0x24] sm:$0xf]
    %v312 = vld [vmem:[#allocation16 + $0x28] sm:$0xf]
    %v313 = vld [vmem:[#allocation16 + $0x2c] sm:$0xf]
    %v314 = vld [vmem:[#allocation16 + $0x30] sm:$0xf]
    %v315 = vld [vmem:[#allocation16 + $0x34] sm:$0xf]
    %v316 = vld [vmem:[#allocation16 + $0x38] sm:$0xf]
    %v317 = vld [vmem:[#allocation16 + $0x3c] sm:$0xf]
    %v334 = vunpack.c.l.b16 %v302
    %v335 = vunpack.c.l.b16 %v303
    %v336 = vunpack.c.l.b16 %v304
    %v337 = vunpack.c.l.b16 %v305
    %v338 = vunpack.c.l.b16 %v306
    %v339 = vunpack.c.l.b16 %v307
    %v340 = vunpack.c.l.b16 %v308
    %v341 = vunpack.c.l.b16 %v309
    %v342 = vunpack.c.l.b16 %v310
    %v343 = vunpack.c.l.b16 %v311
    %v344 = vunpack.c.l.b16 %v312
    %v345 = vunpack.c.l.b16 %v313
    %v346 = vunpack.c.l.b16 %v314
    %v347 = vunpack.c.l.b16 %v315
    %v348 = vunpack.c.l.b16 %v316
    %v349 = vunpack.c.l.b16 %v317
    %v350 = vpack.c.b16 %v335, %v334
    %v351 = vpack.c.b16 %v337, %v336
    %v352 = vpack.c.b16 %v339, %v338
    %v353 = vpack.c.b16 %v341, %v340
    %v354 = vpack.c.b16 %v343, %v342
    %v355 = vpack.c.b16 %v345, %v344
    %v356 = vpack.c.b16 %v347, %v346
    %v357 = vpack.c.b16 %v349, %v348
    %366 = vmatprep.subr.bf16.mxu0 0
    %367 = vmatpush1.bf16.msra.mxu0 %v357
    %368 = vmatprep.subr.bf16.mxu0 0
    %369 = vmatpush1.bf16.msra.mxu0 %v356
    %370 = vmatprep.subr.bf16.mxu0 0
    %371 = vmatpush1.bf16.msra.mxu0 %v355
    %372 = vmatprep.subr.bf16.mxu0 0
    %373 = vmatpush1.bf16.msra.mxu0 %v354
    %374 = vmatprep.subr.bf16.mxu0 0
    %375 = vmatpush1.bf16.msra.mxu0 %v353
    %376 = vmatprep.subr.bf16.mxu0 0
    %377 = vmatpush1.bf16.msra.mxu0 %v352
    %378 = vmatprep.subr.bf16.mxu0 0
    %379 = vmatpush1.bf16.msra.mxu0 %v351
    %380 = vmatprep.subr.bf16.mxu0 0
    %381 = vmatpush1.bf16.msra.mxu0 %v350
    %382 = vmatprep.subr.bf16.mxu0 0
    %383 = vmatpush2.bf16.msra.mxu0 0
    %384 = vmatprep.subr.bf16.mxu0 0
    %385 = vmatpush2.bf16.msra.mxu0 0
    %386 = vmatprep.subr.bf16.mxu0 0
    %387 = vmatpush2.bf16.msra.mxu0 0
    %388 = vmatprep.subr.bf16.mxu0 0
    %389 = vmatpush2.bf16.msra.mxu0 0
    %390 = vmatprep.subr.bf16.mxu0 0
    %391 = vmatpush2.bf16.msra.mxu0 0
    %392 = vmatprep.subr.bf16.mxu0 0
    %393 = vmatpush2.bf16.msra.mxu0 0
    %394 = vmatprep.subr.bf16.mxu0 0
    %395 = vmatpush2.bf16.msra.mxu0 0
    %396 = vmatprep.subr.bf16.mxu0 0
    %397 = vmatpush2.bf16.msra.mxu0 0
    %398 = vmatprep.mubr.bf16.mxu0 0
    %399 = vmatmul.mubr.bf16.gmra.mxu0 %v300
    %v400 = vpop.f32.mrf.mxu0
    %v401 = vadd.f32 0.0, %v400
    %v402 = vpop.f32.mrf.mxu0
    %v403 = vpop.f32.mrf.mxu0
    %v404 = vadd.f32 0.0, %v403
    %v405 = vpop.f32.mrf.mxu0
    %406 = vmatprep.mubr.bf16.mxu0 0
    %407 = vmatmul.mubr.bf16.gmra.mxu0 %v301
    %v408 = vpop.f32.mrf.mxu0
    %v409 = vadd.f32 0.0, %v408
    %v410 = vpop.f32.mrf.mxu0
    %v411 = vpop.f32.mrf.mxu0
    %v412 = vadd.f32 0.0, %v411
    %v413 = vpop.f32.mrf.mxu0
    %414 = vdwg.mxu0
    %v431 = vunpack.c.l.b16 %v284
    %v432 = vunpack.c.l.b16 %v285
    %v433 = vunpack.c.l.b16 %v286
    %v434 = vunpack.c.l.b16 %v287
    %v435 = vunpack.c.l.b16 %v288
    %v436 = vunpack.c.l.b16 %v289
    %v437 = vunpack.c.l.b16 %v290
    %v438 = vunpack.c.l.b16 %v291
    %v439 = vunpack.c.l.b16 %v292
    %v440 = vunpack.c.l.b16 %v293
    %v441 = vunpack.c.l.b16 %v294
    %v442 = vunpack.c.l.b16 %v295
    %v443 = vunpack.c.l.b16 %v296
    %v444 = vunpack.c.l.b16 %v297
    %v445 = vunpack.c.l.b16 %v298
    %v446 = vunpack.c.l.b16 %v299
    %v447 = vpack.c.b16 %v432, %v431
    %v448 = vpack.c.b16 %v434, %v433
    %v449 = vpack.c.b16 %v436, %v435
    %v450 = vpack.c.b16 %v438, %v437
    %v451 = vpack.c.b16 %v440, %v439
    %v452 = vpack.c.b16 %v442, %v441
    %v453 = vpack.c.b16 %v444, %v443
    %v454 = vpack.c.b16 %v446, %v445
    %463 = vmatprep.subr.bf16.mxu0 0
    %464 = vmatpush1.bf16.msra.mxu0 %v454
    %465 = vmatprep.subr.bf16.mxu0 0
    %466 = vmatpush1.bf16.msra.mxu0 %v453
    %467 = vmatprep.subr.bf16.mxu0 0
    %468 = vmatpush1.bf16.msra.mxu0 %v452
    %469 = vmatprep.subr.bf16.mxu0 0
    %470 = vmatpush1.bf16.msra.mxu0 %v451
    %471 = vmatprep.subr.bf16.mxu0 0
    %472 = vmatpush1.bf16.msra.mxu0 %v450
    %473 = vmatprep.subr.bf16.mxu0 0
    %474 = vmatpush1.bf16.msra.mxu0 %v449
    %475 = vmatprep.subr.bf16.mxu0 0
    %476 = vmatpush1.bf16.msra.mxu0 %v448
    %477 = vmatprep.subr.bf16.mxu0 0
    %478 = vmatpush1.bf16.msra.mxu0 %v447
    %479 = vmatprep.subr.bf16.mxu0 0
    %480 = vmatpush2.bf16.msra.mxu0 0
    %481 = vmatprep.subr.bf16.mxu0 0
    %482 = vmatpush2.bf16.msra.mxu0 0
    %483 = vmatprep.subr.bf16.mxu0 0
    %484 = vmatpush2.bf16.msra.mxu0 0
    %485 = vmatprep.subr.bf16.mxu0 0
    %486 = vmatpush2.bf16.msra.mxu0 0
    %487 = vmatprep.subr.bf16.mxu0 0
    %488 = vmatpush2.bf16.msra.mxu0 0
    %489 = vmatprep.subr.bf16.mxu0 0
    %490 = vmatpush2.bf16.msra.mxu0 0
    %491 = vmatprep.subr.bf16.mxu0 0
    %492 = vmatpush2.bf16.msra.mxu0 0
    %493 = vmatprep.subr.bf16.mxu0 0
    %494 = vmatpush2.bf16.msra.mxu0 0
    %495 = vmatprep.mubr.bf16.mxu0 0
    %496 = vmatmul.mubr.bf16.gmra.mxu0 %v220
    %v497 = vpop.f32.mrf.mxu0
    %v498 = vadd.f32 %v401, %v497
    %v499 = vpop.f32.mrf.mxu0
    %v500 = vpop.f32.mrf.mxu0
    %v501 = vadd.f32 %v404, %v500
    %v502 = vpop.f32.mrf.mxu0
    %503 = vmatprep.mubr.bf16.mxu0 0
    %504 = vmatmul.mubr.bf16.gmra.mxu0 %v221
    %v505 = vpop.f32.mrf.mxu0
    %v506 = vadd.f32 %v409, %v505
    %v507 = vpop.f32.mrf.mxu0
    %v508 = vpop.f32.mrf.mxu0
    %v509 = vadd.f32 %v412, %v508
    %v510 = vpop.f32.mrf.mxu0
    %511 = vdwg.mxu0
    %v512 = vld [vmem:[%s10] sm:$0x1]
    %v514 = vlaneseq
    %v515 = vshrl.u32 %v514, 7
    %v516 = vsub.s32 0, %v515
    %v517 = vrot.slane %v512, %v516
    %v519 = vadd.f32 %v498, %v517
    %v520 = vadd.f32 %v501, %v517
    %v521 = vadd.f32 %v506, %v517
    %v522 = vadd.f32 %v509, %v517
    %v523 = vmax.f32 %v519, 0.0
    %v524 = vmax.f32 %v520, 0.0
    %v525 = vmax.f32 %v521, 0.0
    %v526 = vmax.f32 %v522, 0.0
    %v527 = vpack.c.bf16 %v524, %v523
    %v528 = vpack.c.bf16 %v526, %v525
    %v531 = vunpack.c.l.b16 %v527
    %v532 = vunpack.c.h.b16 %v527
    %v533 = vunpack.c.l.b16 %v528
    %v534 = vunpack.c.h.b16 %v528
    %v535 = vpack.c.b16 %v531, %v531
    %v536 = vpack.c.b16 %v532, %v532
    %v537 = vpack.c.b16 %v533, %v533
    %v538 = vpack.c.b16 %v534, %v534
    %543 = vst [vmem:[#allocation2] sm:$0xf] %v535
    %544 = vst [vmem:[#allocation2 + $0x4] sm:$0xf] %v536
    %545 = vst [vmem:[#allocation2 + $0x8] sm:$0xf] %v537
    %546 = vst [vmem:[#allocation2 + $0xc] sm:$0xf] %v538
    %v547 = vld [vmem:[#allocation2] sm:$0xf]
    %v548 = vld [vmem:[#allocation2 + $0x4] sm:$0xf]
    %v549 = vld [vmem:[#allocation2 + $0x8] sm:$0xf]
    %v550 = vld [vmem:[#allocation2 + $0xc] sm:$0xf]
    %v551 = vld [vmem:[#allocation9] sm:$0xf]
    %v552 = vld [vmem:[#allocation9 + $0x4] sm:$0xf]
    %v555 = vunpack.c.l.b16 %v551
    %v556 = vunpack.c.l.b16 %v552
    %v557 = vpack.c.b16 %v556, %v555
    %v562 = vunpack.c.l.b16 %v547
    %v563 = vunpack.c.l.b16 %v548
    %v564 = vunpack.c.l.b16 %v549
    %v565 = vunpack.c.l.b16 %v550
    %v566 = vpack.c.b16 %v563, %v562
    %v567 = vpack.c.b16 %v565, %v564
    %vm570 = vcmask 261120
    %v572 = vsel %vm570, %v557, 0
    %574 = vmatprep.subr.bf16.mxu0 0
    %575 = vmatpush1.bf16.msra.mxu0 0
    %576 = vmatprep.subr.bf16.mxu0 0
    %577 = vmatpush1.bf16.msra.mxu0 0
    %578 = vmatprep.subr.bf16.mxu0 0
    %579 = vmatpush1.bf16.msra.mxu0 0
    %580 = vmatprep.subr.bf16.mxu0 0
    %581 = vmatpush1.bf16.msra.mxu0 0
    %582 = vmatprep.subr.bf16.mxu0 0
    %583 = vmatpush1.bf16.msra.mxu0 0
    %584 = vmatprep.subr.bf16.mxu0 0
    %585 = vmatpush1.bf16.msra.mxu0 0
    %586 = vmatprep.subr.bf16.mxu0 0
    %587 = vmatpush1.bf16.msra.mxu0 %v567
    %588 = vmatprep.subr.bf16.mxu0 0
    %589 = vmatpush1.bf16.msra.mxu0 %v566
    %590 = vmatprep.subr.bf16.mxu0 0
    %591 = vmatpush2.bf16.msra.mxu0 0
    %592 = vmatprep.subr.bf16.mxu0 0
    %593 = vmatpush2.bf16.msra.mxu0 0
    %594 = vmatprep.subr.bf16.mxu0 0
    %595 = vmatpush2.bf16.msra.mxu0 0
    %596 = vmatprep.subr.bf16.mxu0 0
    %597 = vmatpush2.bf16.msra.mxu0 0
    %598 = vmatprep.subr.bf16.mxu0 0
    %599 = vmatpush2.bf16.msra.mxu0 0
    %600 = vmatprep.subr.bf16.mxu0 0
    %601 = vmatpush2.bf16.msra.mxu0 0
    %602 = vmatprep.subr.bf16.mxu0 0
    %603 = vmatpush2.bf16.msra.mxu0 0
    %604 = vmatprep.subr.bf16.mxu0 0
    %605 = vmatpush2.bf16.msra.mxu0 0
    %606 = vmatprep.mubr.bf16.mxu0 0
    %607 = vmatmul.mubr.bf16.gmra.mxu0 %v572
    %v608 = vpop.f32.mrf.mxu0
    %v609 = vadd.f32 0.0, %v608
    %v610 = vpop.f32.mrf.mxu0
    %v611 = vpop.f32.mrf.mxu0
    %v612 = vadd.f32 0.0, %v611
    %v613 = vpop.f32.mrf.mxu0
    %614 = vdwg.mxu0
    %v615 = vld [vmem:[#allocation13] sm:$0xf]
    %v616 = vld [vmem:[#allocation13 + $0x4] sm:$0xf]
    %v617 = vld [vmem:[#allocation13 + $0x8] sm:$0xf]
    %v618 = vld [vmem:[#allocation13 + $0xc] sm:$0xf]
    %v619 = vld [vmem:[#allocation13 + $0x10] sm:$0xf]
    %v620 = vld [vmem:[#allocation13 + $0x14] sm:$0xf]
    %v621 = vld [vmem:[#allocation13 + $0x18] sm:$0xf]
    %v622 = vld [vmem:[#allocation13 + $0x1c] sm:$0xf]
    %v623 = vld [vmem:[#allocation13 + $0x20] sm:$0xf]
    %v624 = vld [vmem:[#allocation13 + $0x24] sm:$0xf]
    %v625 = vld [vmem:[#allocation13 + $0x28] sm:$0xf]
    %v626 = vld [vmem:[#allocation13 + $0x2c] sm:$0xf]
    %v627 = vld [vmem:[#allocation13 + $0x30] sm:$0xf]
    %v628 = vld [vmem:[#allocation13 + $0x34] sm:$0xf]
    %v629 = vld [vmem:[#allocation13 + $0x38] sm:$0xf]
    %v630 = vld [vmem:[#allocation13 + $0x3c] sm:$0xf]
    %v631 = vpack.c.bf16 %v612, %v609
    %v632 = vld [vmem:[#allocation18] sm:$0xf]
    %v633 = vld [vmem:[#allocation18 + $0x4] sm:$0xf]
    %v634 = vld [vmem:[#allocation18 + $0x8] sm:$0xf]
    %v635 = vld [vmem:[#allocation18 + $0xc] sm:$0xf]
    %v636 = vld [vmem:[#allocation18 + $0x10] sm:$0xf]
    %v637 = vld [vmem:[#allocation18 + $0x14] sm:$0xf]
    %v638 = vld [vmem:[#allocation18 + $0x18] sm:$0xf]
    %v639 = vld [vmem:[#allocation18 + $0x1c] sm:$0xf]
    %v640 = vld [vmem:[#allocation18 + $0x20] sm:$0xf]
    %v641 = vld [vmem:[#allocation18 + $0x24] sm:$0xf]
    %v642 = vld [vmem:[#allocation18 + $0x28] sm:$0xf]
    %v643 = vld [vmem:[#allocation18 + $0x2c] sm:$0xf]
    %v644 = vld [vmem:[#allocation18 + $0x30] sm:$0xf]
    %v645 = vld [vmem:[#allocation18 + $0x34] sm:$0xf]
    %v646 = vld [vmem:[#allocation18 + $0x38] sm:$0xf]
    %v647 = vld [vmem:[#allocation18 + $0x3c] sm:$0xf]
    %v664 = vunpack.c.l.b16 %v632
    %v665 = vunpack.c.l.b16 %v633
    %v666 = vunpack.c.l.b16 %v634
    %v667 = vunpack.c.l.b16 %v635
    %v668 = vunpack.c.l.b16 %v636
    %v669 = vunpack.c.l.b16 %v637
    %v670 = vunpack.c.l.b16 %v638
    %v671 = vunpack.c.l.b16 %v639
    %v672 = vunpack.c.l.b16 %v640
    %v673 = vunpack.c.l.b16 %v641
    %v674 = vunpack.c.l.b16 %v642
    %v675 = vunpack.c.l.b16 %v643
    %v676 = vunpack.c.l.b16 %v644
    %v677 = vunpack.c.l.b16 %v645
    %v678 = vunpack.c.l.b16 %v646
    %v679 = vunpack.c.l.b16 %v647
    %v680 = vpack.c.b16 %v665, %v664
    %v681 = vpack.c.b16 %v667, %v666
    %v682 = vpack.c.b16 %v669, %v668
    %v683 = vpack.c.b16 %v671, %v670
    %v684 = vpack.c.b16 %v673, %v672
    %v685 = vpack.c.b16 %v675, %v674
    %v686 = vpack.c.b16 %v677, %v676
    %v687 = vpack.c.b16 %v679, %v678
    %696 = vmatprep.subr.bf16.mxu0 0
    %697 = vmatpush1.bf16.msra.mxu0 %v687
    %698 = vmatprep.subr.bf16.mxu0 0
    %699 = vmatpush1.bf16.msra.mxu0 %v686
    %700 = vmatprep.subr.bf16.mxu0 0
    %701 = vmatpush1.bf16.msra.mxu0 %v685
    %702 = vmatprep.subr.bf16.mxu0 0
    %703 = vmatpush1.bf16.msra.mxu0 %v684
    %704 = vmatprep.subr.bf16.mxu0 0
    %705 = vmatpush1.bf16.msra.mxu0 %v683
    %706 = vmatprep.subr.bf16.mxu0 0
    %707 = vmatpush1.bf16.msra.mxu0 %v682
    %708 = vmatprep.subr.bf16.mxu0 0
    %709 = vmatpush1.bf16.msra.mxu0 %v681
    %710 = vmatprep.subr.bf16.mxu0 0
    %711 = vmatpush1.bf16.msra.mxu0 %v680
    %712 = vmatprep.subr.bf16.mxu0 0
    %713 = vmatpush2.bf16.msra.mxu0 0
    %714 = vmatprep.subr.bf16.mxu0 0
    %715 = vmatpush2.bf16.msra.mxu0 0
    %716 = vmatprep.subr.bf16.mxu0 0
    %717 = vmatpush2.bf16.msra.mxu0 0
    %718 = vmatprep.subr.bf16.mxu0 0
    %719 = vmatpush2.bf16.msra.mxu0 0
    %720 = vmatprep.subr.bf16.mxu0 0
    %721 = vmatpush2.bf16.msra.mxu0 0
    %722 = vmatprep.subr.bf16.mxu0 0
    %723 = vmatpush2.bf16.msra.mxu0 0
    %724 = vmatprep.subr.bf16.mxu0 0
    %725 = vmatpush2.bf16.msra.mxu0 0
    %726 = vmatprep.subr.bf16.mxu0 0
    %727 = vmatpush2.bf16.msra.mxu0 0
    %728 = vmatprep.mubr.bf16.mxu0 0
    %729 = vmatmul.mubr.bf16.gmra.mxu0 %v631
    %v730 = vpop.f32.mrf.mxu0
    %v731 = vadd.f32 0.0, %v730
    %v732 = vpop.f32.mrf.mxu0
    %v733 = vpop.f32.mrf.mxu0
    %v734 = vadd.f32 0.0, %v733
    %v735 = vpop.f32.mrf.mxu0
    %736 = vdwg.mxu0
    %v753 = vunpack.c.l.b16 %v615
    %v754 = vunpack.c.l.b16 %v616
    %v755 = vunpack.c.l.b16 %v617
    %v756 = vunpack.c.l.b16 %v618
    %v757 = vunpack.c.l.b16 %v619
    %v758 = vunpack.c.l.b16 %v620
    %v759 = vunpack.c.l.b16 %v621
    %v760 = vunpack.c.l.b16 %v622
    %v761 = vunpack.c.l.b16 %v623
    %v762 = vunpack.c.l.b16 %v624
    %v763 = vunpack.c.l.b16 %v625
    %v764 = vunpack.c.l.b16 %v626
    %v765 = vunpack.c.l.b16 %v627
    %v766 = vunpack.c.l.b16 %v628
    %v767 = vunpack.c.l.b16 %v629
    %v768 = vunpack.c.l.b16 %v630
    %v769 = vpack.c.b16 %v754, %v753
    %v770 = vpack.c.b16 %v756, %v755
    %v771 = vpack.c.b16 %v758, %v757
    %v772 = vpack.c.b16 %v760, %v759
    %v773 = vpack.c.b16 %v762, %v761
    %v774 = vpack.c.b16 %v764, %v763
    %v775 = vpack.c.b16 %v766, %v765
    %v776 = vpack.c.b16 %v768, %v767
    %785 = vmatprep.subr.bf16.mxu0 0
    %786 = vmatpush1.bf16.msra.mxu0 %v776
    %787 = vmatprep.subr.bf16.mxu0 0
    %788 = vmatpush1.bf16.msra.mxu0 %v775
    %789 = vmatprep.subr.bf16.mxu0 0
    %790 = vmatpush1.bf16.msra.mxu0 %v774
    %791 = vmatprep.subr.bf16.mxu0 0
    %792 = vmatpush1.bf16.msra.mxu0 %v773
    %793 = vmatprep.subr.bf16.mxu0 0
    %794 = vmatpush1.bf16.msra.mxu0 %v772
    %795 = vmatprep.subr.bf16.mxu0 0
    %796 = vmatpush1.bf16.msra.mxu0 %v771
    %797 = vmatprep.subr.bf16.mxu0 0
    %798 = vmatpush1.bf16.msra.mxu0 %v770
    %799 = vmatprep.subr.bf16.mxu0 0
    %800 = vmatpush1.bf16.msra.mxu0 %v769
    %801 = vmatprep.subr.bf16.mxu0 0
    %802 = vmatpush2.bf16.msra.mxu0 0
    %803 = vmatprep.subr.bf16.mxu0 0
    %804 = vmatpush2.bf16.msra.mxu0 0
    %805 = vmatprep.subr.bf16.mxu0 0
    %806 = vmatpush2.bf16.msra.mxu0 0
    %807 = vmatprep.subr.bf16.mxu0 0
    %808 = vmatpush2.bf16.msra.mxu0 0
    %809 = vmatprep.subr.bf16.mxu0 0
    %810 = vmatpush2.bf16.msra.mxu0 0
    %811 = vmatprep.subr.bf16.mxu0 0
    %812 = vmatpush2.bf16.msra.mxu0 0
    %813 = vmatprep.subr.bf16.mxu0 0
    %814 = vmatpush2.bf16.msra.mxu0 0
    %815 = vmatprep.subr.bf16.mxu0 0
    %816 = vmatpush2.bf16.msra.mxu0 0
    %817 = vmatprep.mubr.bf16.mxu0 0
    %818 = vmatmul.mubr.bf16.gmra.mxu0 %v566
    %v819 = vpop.f32.mrf.mxu0
    %v820 = vadd.f32 %v731, %v819
    %v821 = vpop.f32.mrf.mxu0
    %v822 = vpop.f32.mrf.mxu0
    %v823 = vadd.f32 %v734, %v822
    %v824 = vpop.f32.mrf.mxu0
    %825 = vdwg.mxu0
    %v826 = vld [vmem:[%s11] sm:$0x1]
    %v828 = vlaneseq
    %v829 = vshrl.u32 %v828, 7
    %v830 = vsub.s32 0, %v829
    %v831 = vrot.slane %v826, %v830
    %v833 = vadd.f32 %v820, %v831
    %v834 = vadd.f32 %v823, %v831
    %v835 = vmax.f32 %v833, 0.0
    %v836 = vmax.f32 %v834, 0.0
    %v837 = vpack.c.bf16 %v836, %v835
    %v839 = vunpack.c.l.b16 %v837
    %v840 = vunpack.c.h.b16 %v837
    %v841 = vpack.c.b16 %v839, %v839
    %v842 = vpack.c.b16 %v840, %v840
    %845 = vst [vmem:[#allocation3] sm:$0xf] %v841
    %846 = vst [vmem:[#allocation3 + $0x4] sm:$0xf] %v842
    %v847 = vld [vmem:[#allocation3] sm:$0xf]
    %v848 = vld [vmem:[#allocation3 + $0x4] sm:$0xf]
    %v849 = vld [vmem:[#allocation10] sm:$0xf]
    %v850 = vld [vmem:[#allocation10 + $0x4] sm:$0xf]
    %v853 = vunpack.c.l.b16 %v849
    %v854 = vunpack.c.l.b16 %v850
    %v855 = vpack.c.b16 %v854, %v853
    %v858 = vunpack.c.l.b16 %v847
    %v859 = vunpack.c.l.b16 %v848
    %v860 = vpack.c.b16 %v859, %v858
    %vm862 = vcmask 130048
    %v864 = vsel %vm862, %v855, 0
    %866 = vmatprep.subr.bf16.mxu0 0
    %867 = vmatpush1.bf16.msra.mxu0 0
    %868 = vmatprep.subr.bf16.mxu0 0
    %869 = vmatpush1.bf16.msra.mxu0 0
    %870 = vmatprep.subr.bf16.mxu0 0
    %871 = vmatpush1.bf16.msra.mxu0 0
    %872 = vmatprep.subr.bf16.mxu0 0
    %873 = vmatpush1.bf16.msra.mxu0 0
    %874 = vmatprep.subr.bf16.mxu0 0
    %875 = vmatpush1.bf16.msra.mxu0 0
    %876 = vmatprep.subr.bf16.mxu0 0
    %877 = vmatpush1.bf16.msra.mxu0 0
    %878 = vmatprep.subr.bf16.mxu0 0
    %879 = vmatpush1.bf16.msra.mxu0 0
    %880 = vmatprep.subr.bf16.mxu0 0
    %881 = vmatpush1.bf16.msra.mxu0 %v860
    %882 = vmatprep.subr.bf16.mxu0 0
    %883 = vmatpush2.bf16.msra.mxu0 0
    %884 = vmatprep.subr.bf16.mxu0 0
    %885 = vmatpush2.bf16.msra.mxu0 0
    %886 = vmatprep.subr.bf16.mxu0 0
    %887 = vmatpush2.bf16.msra.mxu0 0
    %888 = vmatprep.subr.bf16.mxu0 0
    %889 = vmatpush2.bf16.msra.mxu0 0
    %890 = vmatprep.subr.bf16.mxu0 0
    %891 = vmatpush2.bf16.msra.mxu0 0
    %892 = vmatprep.subr.bf16.mxu0 0
    %893 = vmatpush2.bf16.msra.mxu0 0
    %894 = vmatprep.subr.bf16.mxu0 0
    %895 = vmatpush2.bf16.msra.mxu0 0
    %896 = vmatprep.subr.bf16.mxu0 0
    %897 = vmatpush2.bf16.msra.mxu0 0
    %898 = vmatprep.mubr.bf16.mxu0 0
    %899 = vmatmul.mubr.bf16.gmra.mxu0 %v864
    %v900 = vpop.f32.mrf.mxu0
    %v901 = vadd.f32 0.0, %v900
    %v902 = vpop.f32.mrf.mxu0
    %v903 = vpop.f32.mrf.mxu0
    %v904 = vadd.f32 0.0, %v903
    %v905 = vpop.f32.mrf.mxu0
    %906 = vdwg.mxu0
    %v907 = vld [vmem:[#allocation15] sm:$0xf]
    %v908 = vld [vmem:[#allocation15 + $0x4] sm:$0xf]
    %v909 = vld [vmem:[#allocation15 + $0x8] sm:$0xf]
    %v910 = vld [vmem:[#allocation15 + $0xc] sm:$0xf]
    %v911 = vld [vmem:[#allocation15 + $0x10] sm:$0xf]
    %v912 = vld [vmem:[#allocation15 + $0x14] sm:$0xf]
    %v913 = vld [vmem:[#allocation15 + $0x18] sm:$0xf]
    %v914 = vld [vmem:[#allocation15 + $0x1c] sm:$0xf]
    %v915 = vld [vmem:[#allocation15 + $0x20] sm:$0xf]
    %v916 = vld [vmem:[#allocation15 + $0x24] sm:$0xf]
    %v917 = vld [vmem:[#allocation15 + $0x28] sm:$0xf]
    %v918 = vld [vmem:[#allocation15 + $0x2c] sm:$0xf]
    %v919 = vld [vmem:[#allocation15 + $0x30] sm:$0xf]
    %v920 = vld [vmem:[#allocation15 + $0x34] sm:$0xf]
    %v921 = vld [vmem:[#allocation15 + $0x38] sm:$0xf]
    %v922 = vld [vmem:[#allocation15 + $0x3c] sm:$0xf]
    %v923 = vpack.c.bf16 %v904, %v901
    %v924 = vld [vmem:[#allocation19] sm:$0xf]
    %v925 = vld [vmem:[#allocation19 + $0x4] sm:$0xf]
    %v926 = vld [vmem:[#allocation19 + $0x8] sm:$0xf]
    %v927 = vld [vmem:[#allocation19 + $0xc] sm:$0xf]
    %v928 = vld [vmem:[#allocation19 + $0x10] sm:$0xf]
    %v929 = vld [vmem:[#allocation19 + $0x14] sm:$0xf]
    %v930 = vld [vmem:[#allocation19 + $0x18] sm:$0xf]
    %v931 = vld [vmem:[#allocation19 + $0x1c] sm:$0xf]
    %v932 = vld [vmem:[#allocation19 + $0x20] sm:$0xf]
    %v933 = vld [vmem:[#allocation19 + $0x24] sm:$0xf]
    %v934 = vld [vmem:[#allocation19 + $0x28] sm:$0xf]
    %v935 = vld [vmem:[#allocation19 + $0x2c] sm:$0xf]
    %v936 = vld [vmem:[#allocation19 + $0x30] sm:$0xf]
    %v937 = vld [vmem:[#allocation19 + $0x34] sm:$0xf]
    %v938 = vld [vmem:[#allocation19 + $0x38] sm:$0xf]
    %v939 = vld [vmem:[#allocation19 + $0x3c] sm:$0xf]
    %v956 = vunpack.c.l.b16 %v924
    %v957 = vunpack.c.l.b16 %v925
    %v958 = vunpack.c.l.b16 %v926
    %v959 = vunpack.c.l.b16 %v927
    %v960 = vunpack.c.l.b16 %v928
    %v961 = vunpack.c.l.b16 %v929
    %v962 = vunpack.c.l.b16 %v930
    %v963 = vunpack.c.l.b16 %v931
    %v964 = vunpack.c.l.b16 %v932
    %v965 = vunpack.c.l.b16 %v933
    %v966 = vunpack.c.l.b16 %v934
    %v967 = vunpack.c.l.b16 %v935
    %v968 = vunpack.c.l.b16 %v936
    %v969 = vunpack.c.l.b16 %v937
    %v970 = vunpack.c.l.b16 %v938
    %v971 = vunpack.c.l.b16 %v939
    %v972 = vpack.c.b16 %v957, %v956
    %v973 = vpack.c.b16 %v959, %v958
    %v974 = vpack.c.b16 %v961, %v960
    %v975 = vpack.c.b16 %v963, %v962
    %v976 = vpack.c.b16 %v965, %v964
    %v977 = vpack.c.b16 %v967, %v966
    %v978 = vpack.c.b16 %v969, %v968
    %v979 = vpack.c.b16 %v971, %v970
    %988 = vmatprep.subr.bf16.mxu0 0
    %989 = vmatpush1.bf16.msra.mxu0 %v979
    %990 = vmatprep.subr.bf16.mxu0 0
    %991 = vmatpush1.bf16.msra.mxu0 %v978
    %992 = vmatprep.subr.bf16.mxu0 0
    %993 = vmatpush1.bf16.msra.mxu0 %v977
    %994 = vmatprep.subr.bf16.mxu0 0
    %995 = vmatpush1.bf16.msra.mxu0 %v976
    %996 = vmatprep.subr.bf16.mxu0 0
    %997 = vmatpush1.bf16.msra.mxu0 %v975
    %998 = vmatprep.subr.bf16.mxu0 0
    %999 = vmatpush1.bf16.msra.mxu0 %v974
    %1000 = vmatprep.subr.bf16.mxu0 0
    %1001 = vmatpush1.bf16.msra.mxu0 %v973
    %1002 = vmatprep.subr.bf16.mxu0 0
    %1003 = vmatpush1.bf16.msra.mxu0 %v972
    %1004 = vmatprep.subr.bf16.mxu0 0
    %1005 = vmatpush2.bf16.msra.mxu0 0
    %1006 = vmatprep.subr.bf16.mxu0 0
    %1007 = vmatpush2.bf16.msra.mxu0 0
    %1008 = vmatprep.subr.bf16.mxu0 0
    %1009 = vmatpush2.bf16.msra.mxu0 0
    %1010 = vmatprep.subr.bf16.mxu0 0
    %1011 = vmatpush2.bf16.msra.mxu0 0
    %1012 = vmatprep.subr.bf16.mxu0 0
    %1013 = vmatpush2.bf16.msra.mxu0 0
    %1014 = vmatprep.subr.bf16.mxu0 0
    %1015 = vmatpush2.bf16.msra.mxu0 0
    %1016 = vmatprep.subr.bf16.mxu0 0
    %1017 = vmatpush2.bf16.msra.mxu0 0
    %1018 = vmatprep.subr.bf16.mxu0 0
    %1019 = vmatpush2.bf16.msra.mxu0 0
    %1020 = vmatprep.mubr.bf16.mxu0 0
    %1021 = vmatmul.mubr.bf16.gmra.mxu0 %v923
    %v1022 = vpop.f32.mrf.mxu0
    %v1023 = vadd.f32 0.0, %v1022
    %v1024 = vpop.f32.mrf.mxu0
    %v1025 = vpop.f32.mrf.mxu0
    %v1026 = vadd.f32 0.0, %v1025
    %v1027 = vpop.f32.mrf.mxu0
    %1028 = vdwg.mxu0
    %v1045 = vunpack.c.l.b16 %v907
    %v1046 = vunpack.c.l.b16 %v908
    %v1047 = vunpack.c.l.b16 %v909
    %v1048 = vunpack.c.l.b16 %v910
    %v1049 = vunpack.c.l.b16 %v911
    %v1050 = vunpack.c.l.b16 %v912
    %v1051 = vunpack.c.l.b16 %v913
    %v1052 = vunpack.c.l.b16 %v914
    %v1053 = vunpack.c.l.b16 %v915
    %v1054 = vunpack.c.l.b16 %v916
    %v1055 = vunpack.c.l.b16 %v917
    %v1056 = vunpack.c.l.b16 %v918
    %v1057 = vunpack.c.l.b16 %v919
    %v1058 = vunpack.c.l.b16 %v920
    %v1059 = vunpack.c.l.b16 %v921
    %v1060 = vunpack.c.l.b16 %v922
    %v1061 = vpack.c.b16 %v1046, %v1045
    %v1062 = vpack.c.b16 %v1048, %v1047
    %v1063 = vpack.c.b16 %v1050, %v1049
    %v1064 = vpack.c.b16 %v1052, %v1051
    %v1065 = vpack.c.b16 %v1054, %v1053
    %v1066 = vpack.c.b16 %v1056, %v1055
    %v1067 = vpack.c.b16 %v1058, %v1057
    %v1068 = vpack.c.b16 %v1060, %v1059
    %1077 = vmatprep.subr.bf16.mxu0 0
    %1078 = vmatpush1.bf16.msra.mxu0 %v1068
    %1079 = vmatprep.subr.bf16.mxu0 0
    %1080 = vmatpush1.bf16.msra.mxu0 %v1067
    %1081 = vmatprep.subr.bf16.mxu0 0
    %1082 = vmatpush1.bf16.msra.mxu0 %v1066
    %1083 = vmatprep.subr.bf16.mxu0 0
    %1084 = vmatpush1.bf16.msra.mxu0 %v1065
    %1085 = vmatprep.subr.bf16.mxu0 0
    %1086 = vmatpush1.bf16.msra.mxu0 %v1064
    %1087 = vmatprep.subr.bf16.mxu0 0
    %1088 = vmatpush1.bf16.msra.mxu0 %v1063
    %1089 = vmatprep.subr.bf16.mxu0 0
    %1090 = vmatpush1.bf16.msra.mxu0 %v1062
    %1091 = vmatprep.subr.bf16.mxu0 0
    %1092 = vmatpush1.bf16.msra.mxu0 %v1061
    %1093 = vmatprep.subr.bf16.mxu0 0
    %1094 = vmatpush2.bf16.msra.mxu0 0
    %1095 = vmatprep.subr.bf16.mxu0 0
    %1096 = vmatpush2.bf16.msra.mxu0 0
    %1097 = vmatprep.subr.bf16.mxu0 0
    %1098 = vmatpush2.bf16.msra.mxu0 0
    %1099 = vmatprep.subr.bf16.mxu0 0
    %1100 = vmatpush2.bf16.msra.mxu0 0
    %1101 = vmatprep.subr.bf16.mxu0 0
    %1102 = vmatpush2.bf16.msra.mxu0 0
    %1103 = vmatprep.subr.bf16.mxu0 0
    %1104 = vmatpush2.bf16.msra.mxu0 0
    %1105 = vmatprep.subr.bf16.mxu0 0
    %1106 = vmatpush2.bf16.msra.mxu0 0
    %1107 = vmatprep.subr.bf16.mxu0 0
    %1108 = vmatpush2.bf16.msra.mxu0 0
    %1109 = vmatprep.mubr.bf16.mxu0 0
    %1110 = vmatmul.mubr.bf16.gmra.mxu0 %v860
    %v1111 = vpop.f32.mrf.mxu0
    %v1112 = vadd.f32 %v1023, %v1111
    %v1113 = vpop.f32.mrf.mxu0
    %v1114 = vpop.f32.mrf.mxu0
    %v1115 = vadd.f32 %v1026, %v1114
    %v1116 = vpop.f32.mrf.mxu0
    %1117 = vdwg.mxu0
    %v1118 = vld [vmem:[%s12] sm:$0x1]
    %v1120 = vlaneseq
    %v1121 = vshrl.u32 %v1120, 7
    %v1122 = vsub.s32 0, %v1121
    %v1123 = vrot.slane %v1118, %v1122
    %v1125 = vadd.f32 %v1112, %v1123
    %v1126 = vadd.f32 %v1115, %v1123
    %1127 = vst [vmem:[#allocation21] sm:$0xff] %v1125
    %1128 = vst [vmem:[#allocation21 + $0x8] sm:$0xff] %v1126
    // Predicated region
    $region94: #{tpu_custom_call.1} parent=1 // pred_check
      _
    $region95: #{tpu_custom_call.1} parent=1 // pred_check_branch
      %1130 = sbr.rel (0) target = $region97
    $region96: #{tpu_custom_call.1} parent=1 // pred_region
      %s1132 = ssub.s32 256, 256
      %1133 = vsyncadd [#allocation6], %s1132
      %s1134 = sshll.u32 [#allocation21], 4
      %s1135 = int_to_ptr.vmem [resolvable:$true] %s1134
      %1140 = dma.vmem_to_hbm [thread:$0]  %s1135, 256, %s13, [#allocation6], 128, 128, 8
    $region97: #{tpu_custom_call.1} parent=1 // pred_fallthru
      _
    // Predicated region
    $region98: #{tpu_custom_call.1} parent=1 // pred_check
      _
    $region99: #{tpu_custom_call.1} parent=1 // pred_check_branch
      %1142 = sbr.rel (0) target = $region101
    $region100: #{tpu_custom_call.1} parent=1 // pred_region
      %1143 = dma.done [#allocation6], 256
    $region101: #{tpu_custom_call.1} parent=1 // pred_fallthru
      _
    %1144 = vsyncpa [#allocation5], 1
    %1145 = vsyncpa [#allocation8], 1
    %1146 = vsyncpa [#allocation11], 1
    %1147 = vsyncpa [#allocation14], 1
    %1148 = vsyncpa [#allocation17], 1
    %1149 = vsyncpa [#allocation20], 1
    %1150 = vsyncpa [#allocation6], 1

</llo_original>
